<compile_context>
chip_gen: v7x
topology: tpu7x:2x2x1
jax: 0.10.0
libtpu: 0.0.40
codegen_flags: <defaults>
</compile_context>

<pallas_src>
import functools
import math

import jax
import jax.numpy as jnp
from jax.experimental import pallas as pl
from jax.experimental.pallas import tpu as pltpu


def _tce_kernel(x_ref, wa_ref, wp_ref, emb_ref, proj_ref, *, compute_dtype):
    # x_ref    : (Bt, FD)   batch tile of flattened embeddings (original dtype)
    # wa_ref   : (FD, Pa)   fused aggregation weights (Pa = P or F*P)
    # wp_ref   : (Pa, FD)   fused projection weights (concat or block-diagonal)
    # emb_ref  : (Bt, FD)   out_emb slab (lane-dense)
    # proj_ref : (Bt, FD)   x_project slab (lane-dense)
    x = x_ref[...]

    # x_agg = relu(x_cat @ aggregation_w), all fields at once (N = Pa lanes).
    agg = jnp.dot(x.astype(compute_dtype), wa_ref[...],
                  preferred_element_type=jnp.float32)
    agg = jnp.maximum(agg, 0.0)

    # x_project (pre-relu), all fields at once (N = FD lanes).
    proj = jnp.dot(agg.astype(compute_dtype), wp_ref[...],
                   preferred_element_type=jnp.float32)

    proj_ref[...] = proj.astype(proj_ref.dtype)
    emb_ref[...] = (x.astype(jnp.float32) * jnp.maximum(proj, 0.0)).astype(
        emb_ref.dtype)


def _pick_btile(batch, fd, itemsize=4, budget_bytes=8 * 1024 * 1024):
    """Batch tile so the double-buffered (Bt, FD) slabs (x + 2 outputs) stay
    well inside the default scoped VMEM on every generation (incl. v7x)."""
    bt = budget_bytes // max(1, 6 * fd * itemsize)
    bt = max(8, (bt // 8) * 8)
    return min(batch, bt)


def tce_layer(x_emb, aggregation_w, project_w, *, compute_dtype=jnp.bfloat16,
              btile=None):
    """x_emb: (B, F, D); aggregation_w: (F or 1, F*D, P); project_w: (F, P, D).

    Returns (out_emb, x_project), both (B, F, D), matching the PyTorch module.
    """
    B, F, D = x_emb.shape
    FD = F * D
    P = project_w.shape[1]
    agg_share = aggregation_w.shape[0] == 1
    if compute_dtype is None:
        compute_dtype = x_emb.dtype

    if agg_share:
        # Shared aggregation: a single (FD, P) GEMM, reused for every field by
        # concatenating project_w along the embedding axis -> (P, F*D).
        wa = aggregation_w[0]                                        # (FD, P)
        wp = jnp.transpose(project_w, (1, 0, 2)).reshape(P, FD)      # (P, FD)
    else:
        # Per-field aggregation matrices concatenated along their output axis
        # -> one lane-dense GEMM with N = F*P.
        wa = jnp.transpose(aggregation_w, (1, 0, 2)).reshape(FD, F * P)
        # Block-diagonal projection (F*P, F*D): proj[:, f*D:(f+1)*D] only sees
        # agg[:, f*P:(f+1)*P] @ project_w[f].
        eye = jnp.eye(F, dtype=project_w.dtype)
        wp = jnp.einsum('fpd,fg->fpgd', project_w, eye).reshape(F * P, FD)
    wa = wa.astype(compute_dtype)      # halves weight DMA bytes when bf16
    wp = wp.astype(compute_dtype)
    Pa = wa.shape[1]

    x_flat = x_emb.reshape(B, FD)      # free reshape, no transpose
    if btile is None:
        btile = _pick_btile(B, FD, jnp.dtype(x_emb.dtype).itemsize)
    grid = (pl.cdiv(B, btile),)

    emb_flat, proj_flat = pl.pallas_call(
        functools.partial(_tce_kernel, compute_dtype=compute_dtype),
        out_shape=(
            jax.ShapeDtypeStruct((B, FD), x_emb.dtype),   # out_emb
            jax.ShapeDtypeStruct((B, FD), x_emb.dtype),   # x_project
        ),
        grid_spec=pltpu.PrefetchScalarGridSpec(
            num_scalar_prefetch=0,
            grid=grid,
            in_specs=[
                pl.BlockSpec((btile, FD), lambda b: (b, 0)),   # x_flat tile
                pl.BlockSpec((FD, Pa), lambda b: (0, 0)),      # wa (fetched once)
                pl.BlockSpec((Pa, FD), lambda b: (0, 0)),      # wp (fetched once)
            ],
            out_specs=[
                pl.BlockSpec((btile, FD), lambda b: (b, 0)),   # out_emb slab
                pl.BlockSpec((btile, FD), lambda b: (b, 0)),   # x_project slab
            ],
        ),
        compiler_params=pltpu.CompilerParams(
            dimension_semantics=("parallel",)),   # batch tiles are independent
    )(x_flat, wa, wp)

    return emb_flat.reshape(B, F, D), proj_flat.reshape(B, F, D)


def _xavier_uniform(key, shape):
    # Matches torch.nn.init.xavier_uniform_ fan computation for 3-D tensors.
    receptive = 1
    for s in shape[2:]:
        receptive *= s
    fan_in = shape[1] * receptive
    fan_out = shape[0] * receptive
    bound = math.sqrt(6.0 / (fan_in + fan_out))
    return jax.random.uniform(key, shape, jnp.float32, -bound, bound)


def _reference(x_emb, aggregation_w, project_w):
    B, F, D = x_emb.shape
    x_cat = jnp.broadcast_to(x_emb.reshape(B, -1)[None], (F, B, F * D))
    agg_b = jnp.broadcast_to(aggregation_w, (F,) + aggregation_w.shape[1:])
    x_agg = jax.nn.relu(jnp.einsum('fbi,fip->fbp', x_cat, agg_b))
    x_project = jnp.einsum('fbp,fpd->fbd', x_agg, project_w).transpose(1, 0, 2)
    return x_emb * jax.nn.relu(x_project), x_project


if __name__ == "__main__":
    B, F, D, P = 8, 4, 16, 32
    key = jax.random.PRNGKey(0)
    k_x, k_agg, k_aggs, k_proj = jax.random.split(key, 4)

    x_emb = jax.random.normal(k_x, (B, F, D), jnp.float32)
    aggregation_w = _xavier_uniform(k_agg, (F, F * D, P))        # agg_share=False
    aggregation_w_shared = _xavier_uniform(k_aggs, (1, F * D, P))  # agg_share=True
    project_w = _xavier_uniform(k_proj, (F, P, D))

    # Per-field aggregation, exact f32 compute path.
    out_emb, x_project = tce_layer(x_emb, aggregation_w, project_w,
                                   compute_dtype=jnp.float32)
    jax.block_until_ready((out_emb, x_project))
    ref_emb, ref_proj = _reference(x_emb, aggregation_w, project_w)
    assert jnp.allclose(out_emb, ref_emb, atol=1e-5, rtol=1e-5)
    assert jnp.allclose(x_project, ref_proj, atol=1e-5, rtol=1e-5)

    # Shared aggregation (single shared GEMM inside the kernel), f32 compute.
    out_s, proj_s = tce_layer(x_emb, aggregation_w_shared, project_w,
                              compute_dtype=jnp.float32)
    jax.block_until_ready((out_s, proj_s))
    ref_emb_s, ref_proj_s = _reference(x_emb, aggregation_w_shared, project_w)
    assert jnp.allclose(out_s, ref_emb_s, atol=1e-5, rtol=1e-5)
    assert jnp.allclose(proj_s, ref_proj_s, atol=1e-5, rtol=1e-5)

    # Default bf16 matmul operands (f32 accumulation) -- loose tolerance.
    out_b, proj_b = tce_layer(x_emb, aggregation_w, project_w)
    jax.block_until_ready((out_b, proj_b))
    assert jnp.allclose(proj_b, ref_proj, atol=1e-1, rtol=1e-1)
    assert jnp.allclose(out_b, ref_emb, atol=1e-1, rtol=1e-1)

    print("KERNEL_OK")
</pallas_src>

<mosaic_0001>
module attributes {stable_mosaic.version = 11 : i64} {
  func.func @_tce_kernel(%arg0: i32, %arg1: memref<8x64xf32, #tpu.memory_space<vmem>>, %arg2: memref<64x128xf32, #tpu.memory_space<vmem>>, %arg3: memref<128x64xf32, #tpu.memory_space<vmem>>, %arg4: memref<8x64xf32, #tpu.memory_space<vmem>>, %arg5: memref<8x64xf32, #tpu.memory_space<vmem>>) attributes {dimension_semantics = [#tpu.dimension_semantics<parallel>], iteration_bounds = array<i64: 1>, scalar_prefetch = 0 : i64, scratch_operands = 0 : i64, tpu.core_type = #tpu.core_type<tc>, window_params = [{transform_indices = @transform_0, window_bounds = array<i64: 8, 64>}, {pipeline_mode = #tpu.pipeline_mode<synchronous>, transform_indices = @transform_1, window_bounds = array<i64: 64, 128>}, {pipeline_mode = #tpu.pipeline_mode<synchronous>, transform_indices = @transform_2, window_bounds = array<i64: 128, 64>}, {transform_indices = @transform_3, window_bounds = array<i64: 8, 64>}, {transform_indices = @transform_4, window_bounds = array<i64: 8, 64>}]} {
    %c0 = arith.constant 0 : index
    %c0_0 = arith.constant 0 : index
    %0 = vector.load %arg1[%c0, %c0_0] : memref<8x64xf32, #tpu.memory_space<vmem>>, vector<8x64xf32>
    %c0_1 = arith.constant 0 : index
    %c0_2 = arith.constant 0 : index
    %1 = vector.load %arg2[%c0_1, %c0_2] : memref<64x128xf32, #tpu.memory_space<vmem>>, vector<64x128xf32>
    %cst = arith.constant dense<0.000000e+00> : vector<8x128xf32>
    %2 = tpu.matmul %0, %1, %cst {dimension_numbers = #tpu.dot_dimension_numbers<[1], [0], [0], [1], [0, 0, 1, 1], [], []>} : vector<8x64xf32>, vector<64x128xf32>, vector<8x128xf32> -> vector<8x128xf32>
    %cst_3 = arith.constant 0.000000e+00 : f32
    %3 = vector.broadcast %cst_3 : f32 to vector<8x128xf32>
    %4 = arith.maximumf %2, %3 : vector<8x128xf32>
    %c0_4 = arith.constant 0 : index
    %c0_5 = arith.constant 0 : index
    %5 = vector.load %arg3[%c0_4, %c0_5] : memref<128x64xf32, #tpu.memory_space<vmem>>, vector<128x64xf32>
    %cst_6 = arith.constant dense<0.000000e+00> : vector<8x64xf32>
    %6 = tpu.matmul %4, %5, %cst_6 {dimension_numbers = #tpu.dot_dimension_numbers<[1], [0], [0], [1], [0, 0, 1, 1], [], []>} : vector<8x128xf32>, vector<128x64xf32>, vector<8x64xf32> -> vector<8x64xf32>
    %c0_7 = arith.constant 0 : index
    %c0_8 = arith.constant 0 : index
    %7 = vector.load %arg5[%c0_7, %c0_8] : memref<8x64xf32, #tpu.memory_space<vmem>>, vector<8x64xf32>
    tpu.vector_store %arg5[%c0_7, %c0_8], %6 {strides = array<i32>} : memref<8x64xf32, #tpu.memory_space<vmem>>, vector<8x64xf32>,
    %cst_9 = arith.constant 0.000000e+00 : f32
    %8 = vector.broadcast %cst_9 : f32 to vector<8x64xf32>
    %9 = arith.maximumf %6, %8 : vector<8x64xf32>
    %10 = arith.mulf %0, %9 : vector<8x64xf32>
    %c0_10 = arith.constant 0 : index
    %c0_11 = arith.constant 0 : index
    %11 = vector.load %arg4[%c0_10, %c0_11] : memref<8x64xf32, #tpu.memory_space<vmem>>, vector<8x64xf32>
    tpu.vector_store %arg4[%c0_10, %c0_11], %10 {strides = array<i32>} : memref<8x64xf32, #tpu.memory_space<vmem>>, vector<8x64xf32>,
    return
  }
  func.func @transform_0(%arg0: i32) -> (i32, i32) {
    %c0_i32 = arith.constant 0 : i32
    %c0_i32_0 = arith.constant 0 : i32
    return %arg0, %c0_i32 : i32, i32
  }
  func.func @transform_1(%arg0: i32) -> (i32, i32) {
    %c0_i32 = arith.constant 0 : i32
    %c0_i32_0 = arith.constant 0 : i32
    %c0_i32_1 = arith.constant 0 : i32
    return %c0_i32, %c0_i32_0 : i32, i32
  }
  func.func @transform_2(%arg0: i32) -> (i32, i32) {
    %c0_i32 = arith.constant 0 : i32
    %c0_i32_0 = arith.constant 0 : i32
    %c0_i32_1 = arith.constant 0 : i32
    return %c0_i32, %c0_i32_0 : i32, i32
  }
  func.func @transform_3(%arg0: i32) -> (i32, i32) {
    %c0_i32 = arith.constant 0 : i32
    %c0_i32_0 = arith.constant 0 : i32
    return %arg0, %c0_i32 : i32, i32
  }
  func.func @transform_4(%arg0: i32) -> (i32, i32) {
    %c0_i32 = arith.constant 0 : i32
    %c0_i32_0 = arith.constant 0 : i32
    return %arg0, %c0_i32 : i32, i32
  }
}

</mosaic_0001>

<llo_original>
// kernel: tpu_custom_call.1
$region0: #{tpu_custom_call.1}
  #allocation0 [shape = 'u32[]', space=smem, size = 0x4, offset = 0x4, fixed_abs, tag = 'smem constant byte address 0x4 - core index']
  #allocation1 [shape = 'u32[144,128]{1,0:T(1,128)}', space=vmem, size = 0x12000, scoped, tag = 'internal scratch']
  %s0 = inlined_call_operand.vmem [shape: f32[8,64], index: 0, kind: input, shape index: {}]
  %s1 = inlined_call_operand.vmem [shape: f32[64,128], index: 1, kind: input, shape index: {}]
  %s2 = inlined_call_operand.vmem [shape: f32[128,64], index: 2, kind: input, shape index: {}]
  %s3 = inlined_call_operand.hbm [shape: f32[8,64], index: 3, kind: output, shape index: {0}]
  %s4 = inlined_call_operand.hbm [shape: f32[8,64], index: 4, kind: output, shape index: {1}]
  %5 = xla_tuple %s3, %s4
  %s6 = sld [smem:[#allocation0]]
  $region30: #{tpu_custom_call.1} parent=0
    _
  %s8 = ssub.s32 1, %s6
  %s9 = scalar_select 0, %s8, %s6
  $region1: #{tpu_custom_call.1} parent=0
    #allocation2 [shape = 'u8[4096]{0}', space=vmem, size = 0x1000, scoped, tag = 'output window, operand 0, single buffered']
    #allocation3 [shape = 's32[1]{0}', space=sflag, size = 0x4, scoped, tag = 'scoped memory for tpu_custom_call.1']
    #allocation4 [shape = 'u8[4096]{0}', space=vmem, size = 0x1000, scoped, tag = 'output window, operand 1, single buffered']
    #allocation5 [shape = 's32[1]{0}', space=sflag, size = 0x4, scoped, tag = 'scoped memory for tpu_custom_call.1']
    %10 = vsyncpa [#allocation3], 0
    %11 = vsyncpa [#allocation5], 0
    // Predicated region
    $region2: #{tpu_custom_call.1} parent=1 // pred_check
      _
    $region3: #{tpu_custom_call.1} parent=1 // pred_check_branch
      %13 = sbr.rel (0) target = $region5
    $region4: #{tpu_custom_call.1} parent=1 // pred_region
      _
    $region5: #{tpu_custom_call.1} parent=1 // pred_fallthru
      _
    // Predicated region
    $region6: #{tpu_custom_call.1} parent=1 // pred_check
      _
    $region7: #{tpu_custom_call.1} parent=1 // pred_check_branch
      %15 = sbr.rel (0) target = $region9
    $region8: #{tpu_custom_call.1} parent=1 // pred_region
      _
    $region9: #{tpu_custom_call.1} parent=1 // pred_fallthru
      _
    // Predicated region
    $region10: #{tpu_custom_call.1} parent=1 // pred_check
      _
    $region11: #{tpu_custom_call.1} parent=1 // pred_check_branch
      %17 = sbr.rel (0) target = $region13
    $region12: #{tpu_custom_call.1} parent=1 // pred_region
      _
    $region13: #{tpu_custom_call.1} parent=1 // pred_fallthru
      _
    %v18 = vld [vmem:[%s0] sm:$0xff]
    %v19 = vld [vmem:[%s1] sm:$0xff]
    %v20 = vld [vmem:[%s1 + $0x8] sm:$0xff]
    %v21 = vld [vmem:[%s1 + $0x10] sm:$0xff]
    %v22 = vld [vmem:[%s1 + $0x18] sm:$0xff]
    %v23 = vld [vmem:[%s1 + $0x20] sm:$0xff]
    %v24 = vld [vmem:[%s1 + $0x28] sm:$0xff]
    %v25 = vld [vmem:[%s1 + $0x30] sm:$0xff]
    %v26 = vld [vmem:[%s1 + $0x38] sm:$0xff]
    %vm27 = vcmask 523264
    %v29 = vsel %vm27, %v18, 0
    %31 = vmatprep.subr.mxu0 0.0
    %32 = vmatpush1.msra.mxu0 %v19
    %33 = vmatprep.subr.mxu0 0.0
    %34 = vmatpush1.msra.mxu0 %v20
    %35 = vmatprep.subr.mxu0 0.0
    %36 = vmatpush1.msra.mxu0 %v21
    %37 = vmatprep.subr.mxu0 0.0
    %38 = vmatpush1.msra.mxu0 %v22
    %39 = vmatprep.subr.mxu0 0.0
    %40 = vmatpush1.msra.mxu0 %v23
    %41 = vmatprep.subr.mxu0 0.0
    %42 = vmatpush1.msra.mxu0 %v24
    %43 = vmatprep.subr.mxu0 0.0
    %44 = vmatpush1.msra.mxu0 %v25
    %45 = vmatprep.subr.mxu0 0.0
    %46 = vmatpush1.msra.mxu0 %v26
    %47 = vmatprep.subr.mxu0 0.0
    %48 = vmatpush1.msra.mxu0 0.0
    %49 = vmatprep.subr.mxu0 0.0
    %50 = vmatpush1.msra.mxu0 0.0
    %51 = vmatprep.subr.mxu0 0.0
    %52 = vmatpush1.msra.mxu0 0.0
    %53 = vmatprep.subr.mxu0 0.0
    %54 = vmatpush1.msra.mxu0 0.0
    %55 = vmatprep.subr.mxu0 0.0
    %56 = vmatpush1.msra.mxu0 0.0
    %57 = vmatprep.subr.mxu0 0.0
    %58 = vmatpush1.msra.mxu0 0.0
    %59 = vmatprep.subr.mxu0 0.0
    %60 = vmatpush1.msra.mxu0 0.0
    %61 = vmatprep.subr.mxu0 0.0
    %62 = vmatpush1.msra.mxu0 0.0
    %63 = vmatprep.subr.mxu0 0.0
    %64 = vmatpush1.msra.mxu0 0.0
    %65 = vmatprep.subr.mxu0 0.0
    %66 = vmatpush1.msra.mxu0 0.0
    %67 = vmatprep.subr.mxu0 0.0
    %68 = vmatpush1.msra.mxu0 0.0
    %69 = vmatprep.subr.mxu0 0.0
    %70 = vmatpush1.msra.mxu0 0.0
    %71 = vmatprep.subr.mxu0 0.0
    %72 = vmatpush1.msra.mxu0 0.0
    %73 = vmatprep.subr.mxu0 0.0
    %74 = vmatpush1.msra.mxu0 0.0
    %75 = vmatprep.subr.mxu0 0.0
    %76 = vmatpush1.msra.mxu0 0.0
    %77 = vmatprep.subr.mxu0 0.0
    %78 = vmatpush1.msra.mxu0 0.0
    %79 = vmatprep.subr.mxu0 0.0
    %80 = vmatpush1.msra.mxu0 0.0
    %81 = vmatprep.subr.mxu0 0.0
    %82 = vmatpush1.msra.mxu0 0.0
    %83 = vmatprep.subr.mxu0 0.0
    %84 = vmatpush1.msra.mxu0 0.0
    %85 = vmatprep.subr.mxu0 0.0
    %86 = vmatpush1.msra.mxu0 0.0
    %87 = vmatprep.subr.mxu0 0.0
    %88 = vmatpush1.msra.mxu0 0.0
    %89 = vmatprep.subr.mxu0 0.0
    %90 = vmatpush1.msra.mxu0 0.0
    %91 = vmatprep.subr.mxu0 0.0
    %92 = vmatpush1.msra.mxu0 0.0
    %93 = vmatprep.subr.mxu0 0.0
    %94 = vmatpush1.msra.mxu0 0.0
    %95 = vmatprep.mubr.f32.mxu0 0.0
    %96 = vmatmul.mubr.f32.gmra.mrb[0].mxu0 %v29
    %v97 = vpop.f32.mrb[0].mxu0
    %v98 = vadd.f32 0.0, %v97
    %v99 = vpop.f32.mrb[0].mxu0
    %100 = vdwg.mxu0
    %v101 = vmax.f32 %v98, 0.0
    %v102 = vld [vmem:[%s2] sm:$0xff]
    %v103 = vld [vmem:[%s2 + $0x8] sm:$0xff]
    %v104 = vld [vmem:[%s2 + $0x10] sm:$0xff]
    %v105 = vld [vmem:[%s2 + $0x18] sm:$0xff]
    %v106 = vld [vmem:[%s2 + $0x20] sm:$0xff]
    %v107 = vld [vmem:[%s2 + $0x28] sm:$0xff]
    %v108 = vld [vmem:[%s2 + $0x30] sm:$0xff]
    %v109 = vld [vmem:[%s2 + $0x38] sm:$0xff]
    %v110 = vld [vmem:[%s2 + $0x40] sm:$0xff]
    %v111 = vld [vmem:[%s2 + $0x48] sm:$0xff]
    %v112 = vld [vmem:[%s2 + $0x50] sm:$0xff]
    %v113 = vld [vmem:[%s2 + $0x58] sm:$0xff]
    %v114 = vld [vmem:[%s2 + $0x60] sm:$0xff]
    %v115 = vld [vmem:[%s2 + $0x68] sm:$0xff]
    %v116 = vld [vmem:[%s2 + $0x70] sm:$0xff]
    %v117 = vld [vmem:[%s2 + $0x78] sm:$0xff]
    %118 = vmatprep.subr.mxu0 0.0
    %119 = vmatpush1.msra.mxu0 %v102
    %120 = vmatprep.subr.mxu0 0.0
    %121 = vmatpush1.msra.mxu0 %v103
    %122 = vmatprep.subr.mxu0 0.0
    %123 = vmatpush1.msra.mxu0 %v104
    %124 = vmatprep.subr.mxu0 0.0
    %125 = vmatpush1.msra.mxu0 %v105
    %126 = vmatprep.subr.mxu0 0.0
    %127 = vmatpush1.msra.mxu0 %v106
    %128 = vmatprep.subr.mxu0 0.0
    %129 = vmatpush1.msra.mxu0 %v107
    %130 = vmatprep.subr.mxu0 0.0
    %131 = vmatpush1.msra.mxu0 %v108
    %132 = vmatprep.subr.mxu0 0.0
    %133 = vmatpush1.msra.mxu0 %v109
    %134 = vmatprep.subr.mxu0 0.0
    %135 = vmatpush1.msra.mxu0 %v110
    %136 = vmatprep.subr.mxu0 0.0
    %137 = vmatpush1.msra.mxu0 %v111
    %138 = vmatprep.subr.mxu0 0.0
    %139 = vmatpush1.msra.mxu0 %v112
    %140 = vmatprep.subr.mxu0 0.0
    %141 = vmatpush1.msra.mxu0 %v113
    %142 = vmatprep.subr.mxu0 0.0
    %143 = vmatpush1.msra.mxu0 %v114
    %144 = vmatprep.subr.mxu0 0.0
    %145 = vmatpush1.msra.mxu0 %v115
    %146 = vmatprep.subr.mxu0 0.0
    %147 = vmatpush1.msra.mxu0 %v116
    %148 = vmatprep.subr.mxu0 0.0
    %149 = vmatpush1.msra.mxu0 %v117
    %150 = vmatprep.subr.mxu0 0.0
    %151 = vmatpush1.msra.mxu0 0.0
    %152 = vmatprep.subr.mxu0 0.0
    %153 = vmatpush1.msra.mxu0 0.0
    %154 = vmatprep.subr.mxu0 0.0
    %155 = vmatpush1.msra.mxu0 0.0
    %156 = vmatprep.subr.mxu0 0.0
    %157 = vmatpush1.msra.mxu0 0.0
    %158 = vmatprep.subr.mxu0 0.0
    %159 = vmatpush1.msra.mxu0 0.0
    %160 = vmatprep.subr.mxu0 0.0
    %161 = vmatpush1.msra.mxu0 0.0
    %162 = vmatprep.subr.mxu0 0.0
    %163 = vmatpush1.msra.mxu0 0.0
    %164 = vmatprep.subr.mxu0 0.0
    %165 = vmatpush1.msra.mxu0 0.0
    %166 = vmatprep.subr.mxu0 0.0
    %167 = vmatpush1.msra.mxu0 0.0
    %168 = vmatprep.subr.mxu0 0.0
    %169 = vmatpush1.msra.mxu0 0.0
    %170 = vmatprep.subr.mxu0 0.0
    %171 = vmatpush1.msra.mxu0 0.0
    %172 = vmatprep.subr.mxu0 0.0
    %173 = vmatpush1.msra.mxu0 0.0
    %174 = vmatprep.subr.mxu0 0.0
    %175 = vmatpush1.msra.mxu0 0.0
    %176 = vmatprep.subr.mxu0 0.0
    %177 = vmatpush1.msra.mxu0 0.0
    %178 = vmatprep.subr.mxu0 0.0
    %179 = vmatpush1.msra.mxu0 0.0
    %180 = vmatprep.subr.mxu0 0.0
    %181 = vmatpush1.msra.mxu0 0.0
    %182 = vmatprep.mubr.f32.mxu0 0.0
    %183 = vmatmul.mubr.f32.gmra.mrb[0].mxu0 %v101
    %v184 = vpop.f32.mrb[0].mxu0
    %v185 = vadd.f32 0.0, %v184
    %v186 = vpop.f32.mrb[0].mxu0
    %187 = vdwg.mxu0
    %188 = vst.msk [vmem:[#allocation4] sm:$0xff] %vm27, %v185
    %v189 = vmax.f32 %v185, 0.0
    %v190 = vmul.f32 %v18, %v189
    %191 = vst.msk [vmem:[#allocation2] sm:$0xff] %vm27, %v190
    // Predicated region
    $region14: #{tpu_custom_call.1} parent=1 // pred_check
      _
    $region15: #{tpu_custom_call.1} parent=1 // pred_check_branch
      %193 = sbr.rel (0) target = $region17
    $region16: #{tpu_custom_call.1} parent=1 // pred_region
      %s195 = ssub.s32 128, 128
      %196 = vsyncadd [#allocation3], %s195
      %s198 = sshll.u32 [#allocation2], 4
      %s199 = int_to_ptr.vmem [resolvable:$true] %s198
      %201 = dma.vmem_to_hbm [thread:$0]  %s199, 128, %s3, [#allocation3]
    $region17: #{tpu_custom_call.1} parent=1 // pred_fallthru
      _
    // Predicated region
    $region18: #{tpu_custom_call.1} parent=1 // pred_check
      _
    $region19: #{tpu_custom_call.1} parent=1 // pred_check_branch
      %203 = sbr.rel (0) target = $region21
    $region20: #{tpu_custom_call.1} parent=1 // pred_region
      %s205 = ssub.s32 128, 128
      %206 = vsyncadd [#allocation5], %s205
      %s208 = sshll.u32 [#allocation4], 4
      %s209 = int_to_ptr.vmem [resolvable:$true] %s208
      %211 = dma.vmem_to_hbm [thread:$0]  %s209, 128, %s4, [#allocation5]
    $region21: #{tpu_custom_call.1} parent=1 // pred_fallthru
      _
    // Predicated region
    $region22: #{tpu_custom_call.1} parent=1 // pred_check
      _
    $region23: #{tpu_custom_call.1} parent=1 // pred_check_branch
      %213 = sbr.rel (0) target = $region25
    $region24: #{tpu_custom_call.1} parent=1 // pred_region
      %214 = dma.done [#allocation3], 128
    $region25: #{tpu_custom_call.1} parent=1 // pred_fallthru
      _
    // Predicated region
    $region26: #{tpu_custom_call.1} parent=1 // pred_check
      _
    $region27: #{tpu_custom_call.1} parent=1 // pred_check_branch
      %216 = sbr.rel (0) target = $region29
    $region28: #{tpu_custom_call.1} parent=1 // pred_region
      %217 = dma.done [#allocation5], 128
    $region29: #{tpu_custom_call.1} parent=1 // pred_fallthru
      _
    %218 = vsyncpa [#allocation3], 1
    %219 = vsyncpa [#allocation5], 1

</llo_original>
